<compile_context>
chip_gen: v7x
topology: tpu7x:2x2x1
jax: 0.10.0
libtpu: 0.0.40
codegen_flags: <defaults>
</compile_context>

<pallas_src>
import functools

import numpy as np
import jax
import jax.numpy as jnp
from jax import lax
from jax.experimental import pallas as pl
from jax.experimental.pallas import tpu as pltpu


def _hybrid_loss_kernel(w_ref, x_ref, t_ref, mask_ref, out_ref, *, c, hw, w_cols, k):
    """Per-sample partials: lane0=ce_nll_sum, lane1=dice_inter, lane2=dice_union, lane3=grad_sq_sum."""
    f32 = jnp.float32
    x = x_ref[0].astype(f32)              # (C, HW)  cast after DMA (bf16 stays narrow HBM->VMEM)
    tgt = t_ref[0]                        # (1, HW)  int32 labels

    # ---- single fused pass over classes: running max + argmax + target gather ----
    x0 = x[0:1]
    tlogit = jnp.where(tgt == 0, x0, 0.0)      # logit of the target class, per pixel
    best = x0                                  # running channel max (reused for log-sum-exp)
    seg = jnp.zeros((1, hw), f32)              # argmax class index as float
    for ci in range(1, c):
        xc = x[ci:ci + 1]
        tlogit = tlogit + jnp.where(tgt == ci, xc, 0.0)
        gt = xc > best                          # strict '>' keeps first max (argmax tie-break)
        best = jnp.where(gt, xc, best)
        seg = jnp.where(gt, f32(ci), seg)       # scalar constant: no per-iteration broadcast

    # ---- cross entropy partial: sum over pixels of -log_softmax(x)[target] ----
    # log-sum-exp reuses the running max from the fused pass (no extra jnp.max pass).
    lse = jnp.log(jnp.sum(jnp.exp(x - best), axis=0, keepdims=True))     # (1, HW)
    ce_part = jnp.sum(best + lse - tlogit)

    # ---- dice partials (division happens outside, exactly) ----
    tgt_f = tgt.astype(f32)
    inter = jnp.sum(seg * tgt_f)
    union = jnp.sum(seg + tgt_f)

    # ---- boundary length: 3x3 "same" conv on seg via XLU lane rolls + edge masks ----
    taps = []
    for dy in range(3):
        for dx in range(3):
            off = (dy - 1) * w_cols + (dx - 1)      # flat-index offset of this tap
            shift = (-off) % hw                      # rolled[p] = seg[p + off]
            rolled = seg if shift == 0 else pltpu.roll(seg, shift=shift, axis=1)
            ti = dy * 3 + dx
            taps.append(rolled * mask_ref[ti:ti + 1, :])   # zero the wrapped (out-of-image) pixels
    sq_part = jnp.zeros((), f32)
    for kk in range(k):
        acc = jnp.zeros((1, hw), f32)
        for ti in range(9):
            acc = acc + w_ref[kk * 9 + ti] * taps[ti]      # scalar edge weight from SMEM
        sq_part = sq_part + jnp.sum(acc * acc)

    # ---- pack the four per-sample partials into one full-lane output row ----
    lane = lax.broadcasted_iota(jnp.int32, (1, 1, 128), 2)
    out_ref[...] = jnp.where(
        lane == 0, ce_part,
        jnp.where(lane == 1, inter,
                  jnp.where(lane == 2, union,
                            jnp.where(lane == 3, sq_part, 0.0))))


def hybrid_loss_2d(x, targets, edge_op):
    """Pallas implementation of HybridLoss2d.forward(inputs, targets)."""
    n, c, h, w = x.shape
    k = edge_op.shape[0]
    hw = h * w

    # NLLLoss2d(weight=None, size_average=True): mean over all N*H*W pixels.
    ce_denom = float(n * h * w)

    # compute_length: gx = torch.squeeze(g2**2); gx = gx.sum(dim=0); gm = gx.mean()
    conv_shape = (n, k, h, w)
    sq_shape = tuple(s for s in conv_shape if s != 1)      # torch.squeeze semantics
    len_denom = float(np.prod(sq_shape[1:])) if len(sq_shape) > 1 else 1.0

    # Lane-dense layouts: spatial flattened onto the last (lane) axis.  Logits
    # keep their native dtype; the kernel casts to f32 after the DMA.
    x3 = x.reshape(n, c, hw)
    t3 = targets.astype(jnp.int32).reshape(n, 1, hw)
    edge_flat = edge_op.reshape(-1).astype(jnp.float32)    # (K*9,) scalars -> SMEM (scalar prefetch)

    # Host-precomputed boundary masks for the 9 conv taps (zero padding of 1px).
    rr, cc = np.meshgrid(np.arange(h), np.arange(w), indexing="ij")
    masks = np.zeros((9, hw), np.float32)
    for dy in range(3):
        for dx in range(3):
            ok = ((rr + dy - 1 >= 0) & (rr + dy - 1 < h) &
                  (cc + dx - 1 >= 0) & (cc + dx - 1 < w))
            masks[dy * 3 + dx] = ok.reshape(-1).astype(np.float32)
    masks = jnp.asarray(masks)

    kernel = functools.partial(_hybrid_loss_kernel, c=c, hw=hw, w_cols=w, k=k)

    # TODO(synk): for very large H*W, additionally tile the spatial axis (with a
    # 1-row halo for the conv) so per-sample slabs stay within the VMEM budget.
    parts = pl.pallas_call(
        kernel,
        out_shape=jax.ShapeDtypeStruct((n, 1, 128), jnp.float32),
        grid_spec=pltpu.PrefetchScalarGridSpec(
            num_scalar_prefetch=1,
            grid=(n,),
            in_specs=[
                pl.BlockSpec((1, c, hw), lambda i, w_s: (i, 0, 0)),   # logits (one sample)
                pl.BlockSpec((1, 1, hw), lambda i, w_s: (i, 0, 0)),   # targets (one sample)
                pl.BlockSpec((9, hw), lambda i, w_s: (0, 0)),         # conv boundary masks (resident)
            ],
            out_specs=pl.BlockSpec((1, 1, 128), lambda i, w_s: (i, 0, 0)),
        ),
        compiler_params=pltpu.CompilerParams(
            dimension_semantics=("parallel",),        # batch shards across TCs on v7x
            vmem_limit_bytes=32 * 1024 * 1024,
        ),
    )(edge_flat, x3, t3, masks)

    ce = jnp.sum(parts[:, 0, 0]) / ce_denom
    dice = jnp.mean(2.0 * parts[:, 0, 1] / (parts[:, 0, 2] + 1e-05))
    length = jnp.sum(parts[:, 0, 3]) / len_denom
    return ce - 0.1 * dice + length


def _reference_loss(x, targets, edge_op):
    """Plain-JAX replica of the PyTorch forward, for verification."""
    logp = jax.nn.log_softmax(x, axis=1)
    nll = -jnp.take_along_axis(logp, targets[:, None].astype(jnp.int32), axis=1)[:, 0]
    ce = jnp.mean(nll)

    seg = jnp.argmax(x, axis=1).astype(jnp.float32)
    t = targets.astype(jnp.float32)
    inter = jnp.sum(seg * t, axis=(1, 2))
    union = jnp.sum(seg + t, axis=(1, 2))
    dice = jnp.mean(2.0 * inter / (union + 1e-05))

    g2 = jax.lax.conv_general_dilated(
        seg[:, None], edge_op, window_strides=(1, 1), padding=((1, 1), (1, 1)),
        dimension_numbers=('NCHW', 'OIHW', 'NCHW'))
    gx = jnp.squeeze(g2 ** 2)
    gm = jnp.mean(jnp.sum(gx, axis=0))
    return ce - 0.1 * dice + gm


if __name__ == "__main__":
    key = jax.random.PRNGKey(0)
    kx, kt = jax.random.split(key)

    N, C, H, W = 2, 4, 16, 16
    x = jax.random.normal(kx, (N, C, H, W), dtype=jnp.float32)
    targets = jax.random.randint(kt, (N, H, W), 0, C, dtype=jnp.int32)

    # Deterministic edge operator (module parameter): Sobel-x / Sobel-y, shape (2, 1, 3, 3).
    sobel_x = np.array([[-1.0, 0.0, 1.0],
                        [-2.0, 0.0, 2.0],
                        [-1.0, 0.0, 1.0]], dtype=np.float32)
    sobel_y = sobel_x.T
    edge_op = jnp.asarray(np.stack([sobel_x, sobel_y])[:, None])   # (2, 1, 3, 3)

    loss = hybrid_loss_2d(x, targets, edge_op)
    loss = jax.block_until_ready(loss)

    ref = jax.block_until_ready(_reference_loss(x, targets, edge_op))
    np.testing.assert_allclose(np.asarray(loss), np.asarray(ref), rtol=1e-3, atol=1e-3)

    print("KERNEL_OK")
</pallas_src>

<mosaic_0001>
module attributes {stable_mosaic.version = 11 : i64} {
  func.func @_hybrid_loss_kernel(%arg0: i32, %arg1: memref<18xf32, #tpu.memory_space<smem>>, %arg2: memref<1x4x256xf32, #tpu.memory_space<vmem>>, %arg3: memref<1x1x256xi32, #tpu.memory_space<vmem>>, %arg4: memref<9x256xf32, #tpu.memory_space<vmem>>, %arg5: memref<1x1x128xf32, #tpu.memory_space<vmem>>) attributes {dimension_semantics = [#tpu.dimension_semantics<parallel>], iteration_bounds = array<i64: 2>, scalar_prefetch = 1 : i64, scratch_operands = 0 : i64, tpu.core_type = #tpu.core_type<tc>, window_params = [{transform_indices = @transform_0, window_bounds = array<i64: 1, 4, 256>}, {transform_indices = @transform_1, window_bounds = array<i64: 1, 1, 256>}, {pipeline_mode = #tpu.pipeline_mode<synchronous>, transform_indices = @transform_2, window_bounds = array<i64: 9, 256>}, {transform_indices = @transform_3, window_bounds = array<i64: 1, 1, 128>}]} {
    %c0 = arith.constant 0 : index
    %c0_0 = arith.constant 0 : index
    %c0_1 = arith.constant 0 : index
    %0 = vector.load %arg2[%c0, %c0_0, %c0_1] : memref<1x4x256xf32, #tpu.memory_space<vmem>>, vector<1x4x256xf32>
    %1 = vector.shape_cast %0 : vector<1x4x256xf32> to vector<4x256xf32>
    %c0_2 = arith.constant 0 : index
    %c0_3 = arith.constant 0 : index
    %c0_4 = arith.constant 0 : index
    %2 = vector.load %arg3[%c0_2, %c0_3, %c0_4] : memref<1x1x256xi32, #tpu.memory_space<vmem>>, vector<1x1x256xi32>
    %3 = vector.shape_cast %2 : vector<1x1x256xi32> to vector<1x256xi32>
    %4 = vector.extract_strided_slice %1 {offsets = [0, 0], sizes = [1, 256], strides = [1, 1]} : vector<4x256xf32> to vector<1x256xf32>
    %c0_i32 = arith.constant 0 : i32
    %5 = vector.broadcast %c0_i32 : i32 to vector<1x256xi32>
    %6 = arith.cmpi eq, %3, %5 : vector<1x256xi32>
    %cst = arith.constant 0.000000e+00 : f32
    %7 = vector.broadcast %cst : f32 to vector<1x256xf32>
    %8 = arith.select %6, %4, %7 : vector<1x256xi1>, vector<1x256xf32>
    %cst_5 = arith.constant 0.000000e+00 : f32
    %9 = vector.broadcast %cst_5 : f32 to vector<1x256xf32>
    %10 = vector.extract_strided_slice %1 {offsets = [1, 0], sizes = [1, 256], strides = [1, 1]} : vector<4x256xf32> to vector<1x256xf32>
    %c1_i32 = arith.constant 1 : i32
    %11 = vector.broadcast %c1_i32 : i32 to vector<1x256xi32>
    %12 = arith.cmpi eq, %3, %11 : vector<1x256xi32>
    %cst_6 = arith.constant 0.000000e+00 : f32
    %13 = vector.broadcast %cst_6 : f32 to vector<1x256xf32>
    %14 = arith.select %12, %10, %13 : vector<1x256xi1>, vector<1x256xf32>
    %15 = arith.addf %8, %14 : vector<1x256xf32>
    %16 = arith.cmpf ogt, %10, %4 : vector<1x256xf32>
    %17 = arith.select %16, %10, %4 : vector<1x256xi1>, vector<1x256xf32>
    %cst_7 = arith.constant 1.000000e+00 : f32
    %18 = vector.broadcast %cst_7 : f32 to vector<1x256xf32>
    %19 = arith.select %16, %18, %9 : vector<1x256xi1>, vector<1x256xf32>
    %20 = vector.extract_strided_slice %1 {offsets = [2, 0], sizes = [1, 256], strides = [1, 1]} : vector<4x256xf32> to vector<1x256xf32>
    %c2_i32 = arith.constant 2 : i32
    %21 = vector.broadcast %c2_i32 : i32 to vector<1x256xi32>
    %22 = arith.cmpi eq, %3, %21 : vector<1x256xi32>
    %cst_8 = arith.constant 0.000000e+00 : f32
    %23 = vector.broadcast %cst_8 : f32 to vector<1x256xf32>
    %24 = arith.select %22, %20, %23 : vector<1x256xi1>, vector<1x256xf32>
    %25 = arith.addf %15, %24 : vector<1x256xf32>
    %26 = arith.cmpf ogt, %20, %17 : vector<1x256xf32>
    %27 = arith.select %26, %20, %17 : vector<1x256xi1>, vector<1x256xf32>
    %cst_9 = arith.constant 2.000000e+00 : f32
    %28 = vector.broadcast %cst_9 : f32 to vector<1x256xf32>
    %29 = arith.select %26, %28, %19 : vector<1x256xi1>, vector<1x256xf32>
    %30 = vector.extract_strided_slice %1 {offsets = [3, 0], sizes = [1, 256], strides = [1, 1]} : vector<4x256xf32> to vector<1x256xf32>
    %c3_i32 = arith.constant 3 : i32
    %31 = vector.broadcast %c3_i32 : i32 to vector<1x256xi32>
    %32 = arith.cmpi eq, %3, %31 : vector<1x256xi32>
    %cst_10 = arith.constant 0.000000e+00 : f32
    %33 = vector.broadcast %cst_10 : f32 to vector<1x256xf32>
    %34 = arith.select %32, %30, %33 : vector<1x256xi1>, vector<1x256xf32>
    %35 = arith.addf %25, %34 : vector<1x256xf32>
    %36 = arith.cmpf ogt, %30, %27 : vector<1x256xf32>
    %37 = arith.select %36, %30, %27 : vector<1x256xi1>, vector<1x256xf32>
    %cst_11 = arith.constant 3.000000e+00 : f32
    %38 = vector.broadcast %cst_11 : f32 to vector<1x256xf32>
    %39 = arith.select %36, %38, %29 : vector<1x256xi1>, vector<1x256xf32>
    %40 = vector.broadcast %37 : vector<1x256xf32> to vector<4x256xf32>
    %41 = arith.subf %1, %40 : vector<4x256xf32>
    %42 = math.exp %41 : vector<4x256xf32>
    %cst_12 = arith.constant dense<0.000000e+00> : vector<256xf32>
    %43 = vector.multi_reduction <add>, %42, %cst_12 [0] : vector<4x256xf32> to vector<256xf32>
    %44 = vector.shape_cast %43 : vector<256xf32> to vector<1x256xf32>
    %45 = math.log %44 : vector<1x256xf32>
    %46 = arith.addf %37, %45 : vector<1x256xf32>
    %47 = arith.subf %46, %35 : vector<1x256xf32>
    %48 = vector.shape_cast %47 : vector<1x256xf32> to vector<1x1x256xf32>
    %cst_13 = arith.constant dense<0.000000e+00> : vector<1xf32>
    %49 = vector.multi_reduction <add>, %48, %cst_13 [1, 2] : vector<1x1x256xf32> to vector<1xf32>
    %50 = vector.shape_cast %49 : vector<1xf32> to vector<1x1x1xf32>
    %51 = vector.extract %50[0, 0, 0] : f32 from vector<1x1x1xf32>
    %52 = arith.sitofp %3 : vector<1x256xi32> to vector<1x256xf32>
    %53 = arith.mulf %39, %52 : vector<1x256xf32>
    %54 = vector.shape_cast %53 : vector<1x256xf32> to vector<1x1x256xf32>
    %cst_14 = arith.constant dense<0.000000e+00> : vector<1xf32>
    %55 = vector.multi_reduction <add>, %54, %cst_14 [1, 2] : vector<1x1x256xf32> to vector<1xf32>
    %56 = vector.shape_cast %55 : vector<1xf32> to vector<1x1x1xf32>
    %57 = vector.extract %56[0, 0, 0] : f32 from vector<1x1x1xf32>
    %58 = arith.addf %39, %52 : vector<1x256xf32>
    %59 = vector.shape_cast %58 : vector<1x256xf32> to vector<1x1x256xf32>
    %cst_15 = arith.constant dense<0.000000e+00> : vector<1xf32>
    %60 = vector.multi_reduction <add>, %59, %cst_15 [1, 2] : vector<1x1x256xf32> to vector<1xf32>
    %61 = vector.shape_cast %60 : vector<1xf32> to vector<1x1x1xf32>
    %62 = vector.extract %61[0, 0, 0] : f32 from vector<1x1x1xf32>
    %c17_i32 = arith.constant 17 : i32
    %63 = tpu.dynamic_rotate %39 by %c17_i32 dim 1 : vector<1x256xf32>, i32 -> vector<1x256xf32>
    %c0_16 = arith.constant 0 : index
    %c0_17 = arith.constant 0 : index
    %64 = vector.load %arg4[%c0_16, %c0_17] : memref<9x256xf32, #tpu.memory_space<vmem>>, vector<1x256xf32>
    %65 = arith.mulf %63, %64 : vector<1x256xf32>
    %c16_i32 = arith.constant 16 : i32
    %66 = tpu.dynamic_rotate %39 by %c16_i32 dim 1 : vector<1x256xf32>, i32 -> vector<1x256xf32>
    %c1 = arith.constant 1 : index
    %c0_18 = arith.constant 0 : index
    %67 = vector.load %arg4[%c1, %c0_18] : memref<9x256xf32, #tpu.memory_space<vmem>>, vector<1x256xf32>
    %68 = arith.mulf %66, %67 : vector<1x256xf32>
    %c15_i32 = arith.constant 15 : i32
    %69 = tpu.dynamic_rotate %39 by %c15_i32 dim 1 : vector<1x256xf32>, i32 -> vector<1x256xf32>
    %c2 = arith.constant 2 : index
    %c0_19 = arith.constant 0 : index
    %70 = vector.load %arg4[%c2, %c0_19] : memref<9x256xf32, #tpu.memory_space<vmem>>, vector<1x256xf32>
    %71 = arith.mulf %69, %70 : vector<1x256xf32>
    %c1_i32_20 = arith.constant 1 : i32
    %72 = tpu.dynamic_rotate %39 by %c1_i32_20 dim 1 : vector<1x256xf32>, i32 -> vector<1x256xf32>
    %c3 = arith.constant 3 : index
    %c0_21 = arith.constant 0 : index
    %73 = vector.load %arg4[%c3, %c0_21] : memref<9x256xf32, #tpu.memory_space<vmem>>, vector<1x256xf32>
    %74 = arith.mulf %72, %73 : vector<1x256xf32>
    %c4 = arith.constant 4 : index
    %c0_22 = arith.constant 0 : index
    %75 = vector.load %arg4[%c4, %c0_22] : memref<9x256xf32, #tpu.memory_space<vmem>>, vector<1x256xf32>
    %76 = arith.mulf %39, %75 : vector<1x256xf32>
    %c255_i32 = arith.constant 255 : i32
    %77 = tpu.dynamic_rotate %39 by %c255_i32 dim 1 : vector<1x256xf32>, i32 -> vector<1x256xf32>
    %c5 = arith.constant 5 : index
    %c0_23 = arith.constant 0 : index
    %78 = vector.load %arg4[%c5, %c0_23] : memref<9x256xf32, #tpu.memory_space<vmem>>, vector<1x256xf32>
    %79 = arith.mulf %77, %78 : vector<1x256xf32>
    %c241_i32 = arith.constant 241 : i32
    %80 = tpu.dynamic_rotate %39 by %c241_i32 dim 1 : vector<1x256xf32>, i32 -> vector<1x256xf32>
    %c6 = arith.constant 6 : index
    %c0_24 = arith.constant 0 : index
    %81 = vector.load %arg4[%c6, %c0_24] : memref<9x256xf32, #tpu.memory_space<vmem>>, vector<1x256xf32>
    %82 = arith.mulf %80, %81 : vector<1x256xf32>
    %c240_i32 = arith.constant 240 : i32
    %83 = tpu.dynamic_rotate %39 by %c240_i32 dim 1 : vector<1x256xf32>, i32 -> vector<1x256xf32>
    %c7 = arith.constant 7 : index
    %c0_25 = arith.constant 0 : index
    %84 = vector.load %arg4[%c7, %c0_25] : memref<9x256xf32, #tpu.memory_space<vmem>>, vector<1x256xf32>
    %85 = arith.mulf %83, %84 : vector<1x256xf32>
    %c239_i32 = arith.constant 239 : i32
    %86 = tpu.dynamic_rotate %39 by %c239_i32 dim 1 : vector<1x256xf32>, i32 -> vector<1x256xf32>
    %c8 = arith.constant 8 : index
    %c0_26 = arith.constant 0 : index
    %87 = vector.load %arg4[%c8, %c0_26] : memref<9x256xf32, #tpu.memory_space<vmem>>, vector<1x256xf32>
    %88 = arith.mulf %86, %87 : vector<1x256xf32>
    %cst_27 = arith.constant 0.000000e+00 : f32
    %89 = vector.broadcast %cst_27 : f32 to vector<1x256xf32>
    %c0_28 = arith.constant 0 : index
    %90 = memref.load %arg1[%c0_28] : memref<18xf32, #tpu.memory_space<smem>>
    %91 = vector.broadcast %90 : f32 to vector<1x256xf32>
    %92 = arith.mulf %91, %65 : vector<1x256xf32>
    %93 = arith.addf %89, %92 : vector<1x256xf32>
    %c1_29 = arith.constant 1 : index
    %94 = memref.load %arg1[%c1_29] : memref<18xf32, #tpu.memory_space<smem>>
    %95 = vector.broadcast %94 : f32 to vector<1x256xf32>
    %96 = arith.mulf %95, %68 : vector<1x256xf32>
    %97 = arith.addf %93, %96 : vector<1x256xf32>
    %c2_30 = arith.constant 2 : index
    %98 = memref.load %arg1[%c2_30] : memref<18xf32, #tpu.memory_space<smem>>
    %99 = vector.broadcast %98 : f32 to vector<1x256xf32>
    %100 = arith.mulf %99, %71 : vector<1x256xf32>
    %101 = arith.addf %97, %100 : vector<1x256xf32>
    %c3_31 = arith.constant 3 : index
    %102 = memref.load %arg1[%c3_31] : memref<18xf32, #tpu.memory_space<smem>>
    %103 = vector.broadcast %102 : f32 to vector<1x256xf32>
    %104 = arith.mulf %103, %74 : vector<1x256xf32>
    %105 = arith.addf %101, %104 : vector<1x256xf32>
    %c4_32 = arith.constant 4 : index
    %106 = memref.load %arg1[%c4_32] : memref<18xf32, #tpu.memory_space<smem>>
    %107 = vector.broadcast %106 : f32 to vector<1x256xf32>
    %108 = arith.mulf %107, %76 : vector<1x256xf32>
    %109 = arith.addf %105, %108 : vector<1x256xf32>
    %c5_33 = arith.constant 5 : index
    %110 = memref.load %arg1[%c5_33] : memref<18xf32, #tpu.memory_space<smem>>
    %111 = vector.broadcast %110 : f32 to vector<1x256xf32>
    %112 = arith.mulf %111, %79 : vector<1x256xf32>
    %113 = arith.addf %109, %112 : vector<1x256xf32>
    %c6_34 = arith.constant 6 : index
    %114 = memref.load %arg1[%c6_34] : memref<18xf32, #tpu.memory_space<smem>>
    %115 = vector.broadcast %114 : f32 to vector<1x256xf32>
    %116 = arith.mulf %115, %82 : vector<1x256xf32>
    %117 = arith.addf %113, %116 : vector<1x256xf32>
    %c7_35 = arith.constant 7 : index
    %118 = memref.load %arg1[%c7_35] : memref<18xf32, #tpu.memory_space<smem>>
    %119 = vector.broadcast %118 : f32 to vector<1x256xf32>
    %120 = arith.mulf %119, %85 : vector<1x256xf32>
    %121 = arith.addf %117, %120 : vector<1x256xf32>
    %c8_36 = arith.constant 8 : index
    %122 = memref.load %arg1[%c8_36] : memref<18xf32, #tpu.memory_space<smem>>
    %123 = vector.broadcast %122 : f32 to vector<1x256xf32>
    %124 = arith.mulf %123, %88 : vector<1x256xf32>
    %125 = arith.addf %121, %124 : vector<1x256xf32>
    %126 = arith.mulf %125, %125 : vector<1x256xf32>
    %127 = vector.shape_cast %126 : vector<1x256xf32> to vector<1x1x256xf32>
    %cst_37 = arith.constant dense<0.000000e+00> : vector<1xf32>
    %128 = vector.multi_reduction <add>, %127, %cst_37 [1, 2] : vector<1x1x256xf32> to vector<1xf32>
    %129 = vector.shape_cast %128 : vector<1xf32> to vector<1x1x1xf32>
    %130 = vector.extract %129[0, 0, 0] : f32 from vector<1x1x1xf32>
    %cst_38 = arith.constant 0.000000e+00 : f32
    %131 = arith.addf %cst_38, %130 : f32
    %cst_39 = arith.constant 0.000000e+00 : f32
    %132 = vector.broadcast %cst_39 : f32 to vector<1x256xf32>
    %c9 = arith.constant 9 : index
    %133 = memref.load %arg1[%c9] : memref<18xf32, #tpu.memory_space<smem>>
    %134 = vector.broadcast %133 : f32 to vector<1x256xf32>
    %135 = arith.mulf %134, %65 : vector<1x256xf32>
    %136 = arith.addf %132, %135 : vector<1x256xf32>
    %c10 = arith.constant 10 : index
    %137 = memref.load %arg1[%c10] : memref<18xf32, #tpu.memory_space<smem>>
    %138 = vector.broadcast %137 : f32 to vector<1x256xf32>
    %139 = arith.mulf %138, %68 : vector<1x256xf32>
    %140 = arith.addf %136, %139 : vector<1x256xf32>
    %c11 = arith.constant 11 : index
    %141 = memref.load %arg1[%c11] : memref<18xf32, #tpu.memory_space<smem>>
    %142 = vector.broadcast %141 : f32 to vector<1x256xf32>
    %143 = arith.mulf %142, %71 : vector<1x256xf32>
    %144 = arith.addf %140, %143 : vector<1x256xf32>
    %c12 = arith.constant 12 : index
    %145 = memref.load %arg1[%c12] : memref<18xf32, #tpu.memory_space<smem>>
    %146 = vector.broadcast %145 : f32 to vector<1x256xf32>
    %147 = arith.mulf %146, %74 : vector<1x256xf32>
    %148 = arith.addf %144, %147 : vector<1x256xf32>
    %c13 = arith.constant 13 : index
    %149 = memref.load %arg1[%c13] : memref<18xf32, #tpu.memory_space<smem>>
    %150 = vector.broadcast %149 : f32 to vector<1x256xf32>
    %151 = arith.mulf %150, %76 : vector<1x256xf32>
    %152 = arith.addf %148, %151 : vector<1x256xf32>
    %c14 = arith.constant 14 : index
    %153 = memref.load %arg1[%c14] : memref<18xf32, #tpu.memory_space<smem>>
    %154 = vector.broadcast %153 : f32 to vector<1x256xf32>
    %155 = arith.mulf %154, %79 : vector<1x256xf32>
    %156 = arith.addf %152, %155 : vector<1x256xf32>
    %c15 = arith.constant 15 : index
    %157 = memref.load %arg1[%c15] : memref<18xf32, #tpu.memory_space<smem>>
    %158 = vector.broadcast %157 : f32 to vector<1x256xf32>
    %159 = arith.mulf %158, %82 : vector<1x256xf32>
    %160 = arith.addf %156, %159 : vector<1x256xf32>
    %c16 = arith.constant 16 : index
    %161 = memref.load %arg1[%c16] : memref<18xf32, #tpu.memory_space<smem>>
    %162 = vector.broadcast %161 : f32 to vector<1x256xf32>
    %163 = arith.mulf %162, %85 : vector<1x256xf32>
    %164 = arith.addf %160, %163 : vector<1x256xf32>
    %c17 = arith.constant 17 : index
    %165 = memref.load %arg1[%c17] : memref<18xf32, #tpu.memory_space<smem>>
    %166 = vector.broadcast %165 : f32 to vector<1x256xf32>
    %167 = arith.mulf %166, %88 : vector<1x256xf32>
    %168 = arith.addf %164, %167 : vector<1x256xf32>
    %169 = arith.mulf %168, %168 : vector<1x256xf32>
    %170 = vector.shape_cast %169 : vector<1x256xf32> to vector<1x1x256xf32>
    %cst_40 = arith.constant dense<0.000000e+00> : vector<1xf32>
    %171 = vector.multi_reduction <add>, %170, %cst_40 [1, 2] : vector<1x1x256xf32> to vector<1xf32>
    %172 = vector.shape_cast %171 : vector<1xf32> to vector<1x1x1xf32>
    %173 = vector.extract %172[0, 0, 0] : f32 from vector<1x1x1xf32>
    %174 = arith.addf %131, %173 : f32
    %175 = tpu.iota {dimensions = array<i32: 2>} : vector<1x1x128xi32>
    %c0_i32_41 = arith.constant 0 : i32
    %176 = vector.broadcast %c0_i32_41 : i32 to vector<1x1x128xi32>
    %177 = arith.cmpi eq, %175, %176 : vector<1x1x128xi32>
    %c1_i32_42 = arith.constant 1 : i32
    %178 = vector.broadcast %c1_i32_42 : i32 to vector<1x1x128xi32>
    %179 = arith.cmpi eq, %175, %178 : vector<1x1x128xi32>
    %c2_i32_43 = arith.constant 2 : i32
    %180 = vector.broadcast %c2_i32_43 : i32 to vector<1x1x128xi32>
    %181 = arith.cmpi eq, %175, %180 : vector<1x1x128xi32>
    %c3_i32_44 = arith.constant 3 : i32
    %182 = vector.broadcast %c3_i32_44 : i32 to vector<1x1x128xi32>
    %183 = arith.cmpi eq, %175, %182 : vector<1x1x128xi32>
    %cst_45 = arith.constant 0.000000e+00 : f32
    %184 = vector.broadcast %174 : f32 to vector<1x1x128xf32>
    %185 = vector.broadcast %cst_45 : f32 to vector<1x1x128xf32>
    %186 = arith.select %183, %184, %185 : vector<1x1x128xi1>, vector<1x1x128xf32>
    %187 = vector.broadcast %62 : f32 to vector<1x1x128xf32>
    %188 = arith.select %181, %187, %186 : vector<1x1x128xi1>, vector<1x1x128xf32>
    %189 = vector.broadcast %57 : f32 to vector<1x1x128xf32>
    %190 = arith.select %179, %189, %188 : vector<1x1x128xi1>, vector<1x1x128xf32>
    %191 = vector.broadcast %51 : f32 to vector<1x1x128xf32>
    %192 = arith.select %177, %191, %190 : vector<1x1x128xi1>, vector<1x1x128xf32>
    %c0_46 = arith.constant 0 : index
    %c0_47 = arith.constant 0 : index
    %c0_48 = arith.constant 0 : index
    %193 = vector.load %arg5[%c0_46, %c0_47, %c0_48] : memref<1x1x128xf32, #tpu.memory_space<vmem>>, vector<1x1x128xf32>
    tpu.vector_store %arg5[%c0_46, %c0_47, %c0_48], %192 {strides = array<i32>} : memref<1x1x128xf32, #tpu.memory_space<vmem>>, vector<1x1x128xf32>,
    return
  }
  func.func @transform_0(%arg0: i32, %arg1: memref<18xf32, #tpu.memory_space<smem>>) -> (i32, i32, i32) {
    %c0_i32 = arith.constant 0 : i32
    %c0_i32_0 = arith.constant 0 : i32
    %c0_i32_1 = arith.constant 0 : i32
    return %arg0, %c0_i32, %c0_i32_0 : i32, i32, i32
  }
  func.func @transform_1(%arg0: i32, %arg1: memref<18xf32, #tpu.memory_space<smem>>) -> (i32, i32, i32) {
    %c0_i32 = arith.constant 0 : i32
    %c0_i32_0 = arith.constant 0 : i32
    %c0_i32_1 = arith.constant 0 : i32
    return %arg0, %c0_i32, %c0_i32_0 : i32, i32, i32
  }
  func.func @transform_2(%arg0: i32, %arg1: memref<18xf32, #tpu.memory_space<smem>>) -> (i32, i32) {
    %c0_i32 = arith.constant 0 : i32
    %c0_i32_0 = arith.constant 0 : i32
    %c0_i32_1 = arith.constant 0 : i32
    return %c0_i32, %c0_i32_0 : i32, i32
  }
  func.func @transform_3(%arg0: i32, %arg1: memref<18xf32, #tpu.memory_space<smem>>) -> (i32, i32, i32) {
    %c0_i32 = arith.constant 0 : i32
    %c0_i32_0 = arith.constant 0 : i32
    %c0_i32_1 = arith.constant 0 : i32
    return %arg0, %c0_i32, %c0_i32_0 : i32, i32, i32
  }
}

</mosaic_0001>

<llo_original>
// kernel: tpu_custom_call.1
$region0: #{tpu_custom_call.1}
  #allocation0 [shape = 'u32[]', space=smem, size = 0x4, offset = 0x4, fixed_abs, tag = 'smem constant byte address 0x4 - core index']
  #allocation1 [shape = 'u32[144,128]{1,0:T(1,128)}', space=vmem, size = 0x12000, scoped, tag = 'internal scratch']
  #allocation2 [shape = 's32[1]{0}', space=sflag, size = 0x4, scoped, tag = 'scoped memory for tpu_custom_call.1']
  #allocation3 [shape = 'u8[512]{0}', space=smem, size = 0x200, scoped, tag = 'prefetched SMEM operand 0']
  %s0 = inlined_call_operand.hbm [shape: f32[18], index: 0, kind: input, shape index: {}]
  %s1 = inlined_call_operand.hbm [shape: f32[2,4,256], index: 1, kind: input, shape index: {}]
  %s2 = inlined_call_operand.vmem [shape: s32[2,1,256], index: 2, kind: input, shape index: {}]
  %s3 = inlined_call_operand.hbm [shape: f32[9,256], index: 3, kind: input, shape index: {}]
  %s4 = inlined_call_operand.hbm [shape: f32[2,1,128], index: 4, kind: output, shape index: {}]
  %s5 = sld [smem:[#allocation0]]
  $region53: #{tpu_custom_call.1} parent=0
    _
  %s7 = ssub.s32 1, %s5
  %s8 = scalar_select 0, %s7, %s5
  %10 = dma.hbm_to_smem %s0, 16, [#allocation3], [#allocation2]
  %11 = dma.done [#allocation2], 16
  %12 = sfence
  $region1: #{tpu_custom_call.1} parent=0
    #allocation4 [shape = 'u8[8192]{0}', space=vmem, size = 0x2000, scoped, tag = 'input window, operand 1']
    #allocation5 [shape = 's32[2]{0}', space=sflag, size = 0x8, scoped, tag = 'scoped memory for tpu_custom_call.1']
    #allocation6 [shape = 's32[2]{0}', space=sflag, size = 0x8, scoped, tag = 'scoped memory for tpu_custom_call.1']
    #allocation7 [shape = 'u8[16384]{0}', space=vmem, size = 0x4000, scoped, tag = 'input window, operand 3, single buffered']
    #allocation8 [shape = 's32[1]{0}', space=sflag, size = 0x4, scoped, tag = 'scoped memory for tpu_custom_call.1']
    #allocation9 [shape = 'u8[1024]{0}', space=vmem, size = 0x400, scoped, tag = 'output window, operand 0']
    %13 = vsyncpa [#allocation5], 0
    %s14 = scalar_lea.sflag [#allocation5], 1
    %15 = vsyncpa %s14, 0
    %16 = vsyncpa [#allocation8], 0
    %17 = vsyncpa [#allocation6], 0
    %s18 = scalar_lea.sflag [#allocation6], 1
    %19 = vsyncpa %s18, 0
    loop: start=0, step=1, limit=4
    $region2: #{tpu_custom_call.1} parent=1 // loop_pre_header
      _
    $region3: #{tpu_custom_call.1} parent=1 // loop_header
      %s21 = sphi 0, %s25
      %p22 = scmp.ge.s32.totalorder %s21, 4
      %s31 = sphi 0, %s33
      %s34 = sphi 0, %s31
      %s35 = sphi 0, %s34
      %s51 = sphi 0, %s35
      %s57 = sphi 0, %s59
      %s60 = sphi 0, %s57
      %s61 = sphi 0, %s60
      %s77 = sphi 0, %s61
      %s81 = sphi 0, %s81
      %s83 = sphi 0, %s81
      %s84 = sphi 0, %s83
      %s98 = sphi 0, %s84
      %s104 = sphi 0, %s106
      %s107 = sphi 0, %s104
      %s108 = sphi 0, %s107
      %s124 = sphi 0, %s108
    $region4: #{tpu_custom_call.1} parent=1 // loop_header_branch
      %24 = sbr.rel (%p22) target = $region8
    $region5: #{tpu_custom_call.1} parent=1 // loop_body
      %s26 = ssub.s32 %s21, 1
      %s27 = ssub.s32 %s21, 2
      %s28 = sadd.s32 %s21, 1
      %s29 = ssub.s32 %s21, %s28
      %p30 = scmp.eq.s32.totalorder %s29, 0
      %s32 = sadd.s32 %s31, 1
      %s33 = scalar_select %p30, %s31, %s32
      %p36 = pneg %p30
      %p37 = scmp.eq.s32.totalorder %s21, 1
      %p38 = por %p36, %p37
      %p39 = scmp.ne.s32.totalorder %s31, %s34
      %p40 = scmp.eq.s32.totalorder %s21, 0
      %p41 = por %p39, %p40
      %p42 = scmp.ne.s32.totalorder %s31, %s34
      %p43 = scmp.eq.s32.totalorder %s26, 1
      %p44 = por %p42, %p43
      %p45 = scmp.ne.s32.totalorder %s34, %s35
      %p46 = scmp.eq.s32.totalorder %s26, 0
      %p47 = por %p45, %p46
      %p48 = scmp.ne.s32.totalorder %s34, %s35
      %p49 = scmp.eq.s32.totalorder %s27, 1
      %p50 = por %p48, %p49
      %p52 = scmp.ne.s32.totalorder %s35, %s51
      %p53 = scmp.eq.s32.totalorder %s27, 0
      %p54 = por %p52, %p53
      %s55 = ssub.s32 %s21, %s28
      %p56 = scmp.eq.s32.totalorder %s55, 0
      %s58 = sadd.s32 %s57, 1
      %s59 = scalar_select %p56, %s57, %s58
      %p62 = pneg %p56
      %p63 = scmp.eq.s32.totalorder %s21, 1
      %p64 = por %p62, %p63
      %p65 = scmp.ne.s32.totalorder %s57, %s60
      %p66 = scmp.eq.s32.totalorder %s21, 0
      %p67 = por %p65, %p66
      %p68 = scmp.ne.s32.totalorder %s57, %s60
      %p69 = scmp.eq.s32.totalorder %s26, 1
      %p70 = por %p68, %p69
      %p71 = scmp.ne.s32.totalorder %s60, %s61
      %p72 = scmp.eq.s32.totalorder %s26, 0
      %p73 = por %p71, %p72
      %p74 = scmp.ne.s32.totalorder %s60, %s61
      %p75 = scmp.eq.s32.totalorder %s27, 1
      %p76 = por %p74, %p75
      %p78 = scmp.ne.s32.totalorder %s61, %s77
      %p79 = scmp.eq.s32.totalorder %s27, 0
      %p80 = por %p78, %p79
      %s82 = sadd.s32 %s81, 1
      %p85 = scmp.eq.s32.totalorder %s21, 1
      %p86 = scmp.ne.s32.totalorder %s81, %s83
      %p87 = scmp.eq.s32.totalorder %s21, 0
      %p88 = por %p86, %p87
      %p89 = scmp.ne.s32.totalorder %s81, %s83
      %p90 = scmp.eq.s32.totalorder %s26, 1
      %p91 = por %p89, %p90
      %p92 = scmp.ne.s32.totalorder %s83, %s84
      %p93 = scmp.eq.s32.totalorder %s26, 0
      %p94 = por %p92, %p93
      %p95 = scmp.ne.s32.totalorder %s83, %s84
      %p96 = scmp.eq.s32.totalorder %s27, 1
      %p97 = por %p95, %p96
      %p99 = scmp.ne.s32.totalorder %s84, %s98
      %p100 = scmp.eq.s32.totalorder %s27, 0
      %p101 = por %p99, %p100
      %s102 = ssub.s32 %s21, %s28
      %p103 = scmp.eq.s32.totalorder %s102, 0
      %s105 = sadd.s32 %s104, 1
      %s106 = scalar_select %p103, %s104, %s105
      %p109 = pneg %p103
      %p110 = scmp.eq.s32.totalorder %s21, 1
      %p111 = por %p109, %p110
      %p112 = scmp.ne.s32.totalorder %s104, %s107
      %p113 = scmp.eq.s32.totalorder %s21, 0
      %p114 = por %p112, %p113
      %p115 = scmp.ne.s32.totalorder %s104, %s107
      %p116 = scmp.eq.s32.totalorder %s26, 1
      %p117 = por %p115, %p116
      %p118 = scmp.ne.s32.totalorder %s107, %s108
      %p119 = scmp.eq.s32.totalorder %s26, 0
      %p120 = por %p118, %p119
      %p121 = scmp.ne.s32.totalorder %s107, %s108
      %p122 = scmp.eq.s32.totalorder %s27, 1
      %p123 = por %p121, %p122
      %p125 = scmp.ne.s32.totalorder %s108, %s124
      %p126 = scmp.eq.s32.totalorder %s27, 0
      %p127 = por %p125, %p126
      %p128 = scmp.le.s32.totalorder 1, %s21
      %p129 = scmp.lt.s32.totalorder %s21, 3
      %p130 = pnand %p128, %p129
      %p131 = pneg %p130
      // Predicated region
      $region9: #{tpu_custom_call.1} parent=5 // pred_check
        _
      $region10: #{tpu_custom_call.1} parent=5 // pred_check_branch
        %133 = sbr.rel (%p130) target = $region12
      $region11: #{tpu_custom_call.1} parent=5 // pred_region
        %s134 = ssub.s32 %s21, 1
        // Predicated region
        $region13: #{tpu_custom_call.1} parent=11 // pred_check
          %p135 = pneg %p94
        $region14: #{tpu_custom_call.1} parent=11 // pred_check_branch
          %137 = sbr.rel (%p135) target = $region16
        $region15: #{tpu_custom_call.1} parent=11 // pred_region
          %s139 = ssub.s32 512, 512
          %140 = vsyncadd [#allocation8], %s139
          %s141 = sshll.u32 [#allocation7], 4
          %s142 = int_to_ptr.vmem [resolvable:$true] %s141
          %147 = dma.hbm_to_vmem [thread:$0]  %s3, 512, %s142, [#allocation8], 256, 256, 16
        $region16: #{tpu_custom_call.1} parent=11 // pred_fallthru
          _
      $region12: #{tpu_custom_call.1} parent=5 // pred_fallthru
        _
      %p148 = scmp.lt.s32.totalorder %s21, 2
      // Predicated region
      $region17: #{tpu_custom_call.1} parent=5 // pred_check
        %p149 = pneg %p148
      $region18: #{tpu_custom_call.1} parent=5 // pred_check_branch
        %151 = sbr.rel (%p149) target = $region20
      $region19: #{tpu_custom_call.1} parent=5 // pred_region
        // Predicated region
        $region21: #{tpu_custom_call.1} parent=19 // pred_check
          %p152 = pneg %p41
        $region22: #{tpu_custom_call.1} parent=19 // pred_check_branch
          %154 = sbr.rel (%p152) target = $region24
        $region23: #{tpu_custom_call.1} parent=19 // pred_region
          %s155 = sand.u32 %s31, 1
          %s156 = scalar_lea.sflag [#allocation5], %s155
          %s157 = sand.u32 %s31, 1
          %s158 = smul.addr %s157, 8
          %s159 = scalar_lea.vmem [#allocation4], %s158
          %s161 = ssub.s32 128, 128
          %162 = vsyncadd %s156, %s161
          %s163 = smul.addr %s21, 2
          %s164 = smul.addr %s163, 64
          %s165 = scalar_lea.hbm %s1, %s164
          %s167 = sshll.u32 %s159, 4
          %s168 = int_to_ptr.vmem [resolvable:$true] %s167
          %170 = dma.hbm_to_vmem [thread:$0]  %s165, 128, %s168, %s156
        $region24: #{tpu_custom_call.1} parent=19 // pred_fallthru
          _
        // Predicated region
        $region25: #{tpu_custom_call.1} parent=19 // pred_check
          %p171 = pneg %p67
        $region26: #{tpu_custom_call.1} parent=19 // pred_check_branch
          %173 = sbr.rel (%p171) target = $region28
        $region27: #{tpu_custom_call.1} parent=19 // pred_region
          %p174 = scmp.lt.s32.totalorder %s21, 1
          %s175 = scalar_select %p174, %s21, 1
          %s176 = smul.addr %s175, 2
          %s177 = scalar_lea.vmem %s2, %s176
        $region28: #{tpu_custom_call.1} parent=19 // pred_fallthru
          _
      $region20: #{tpu_custom_call.1} parent=5 // pred_fallthru
        _
      %p178 = scmp.le.s32.totalorder 1, %s21
      %p179 = scmp.lt.s32.totalorder %s21, 3
      %p180 = pnand %p178, %p179
      %p181 = pneg %p180
      // Predicated region
      $region29: #{tpu_custom_call.1} parent=5 // pred_check
        _
      $region30: #{tpu_custom_call.1} parent=5 // pred_check_branch
        %183 = sbr.rel (%p180) target = $region32
      $region31: #{tpu_custom_call.1} parent=5 // pred_region
        %s184 = ssub.s32 %s21, 1
        %s185 = sand.u32 %s34, 1
        %s186 = scalar_lea.sflag [#allocation5], %s185
        %s187 = sand.u32 %s34, 1
        %s188 = smul.addr %s187, 8
        %s189 = scalar_lea.vmem [#allocation4], %s188
        // Predicated region
        $region33: #{tpu_custom_call.1} parent=31 // pred_check
          %p190 = pneg %p47
        $region34: #{tpu_custom_call.1} parent=31 // pred_check_branch
          %192 = sbr.rel (%p190) target = $region36
        $region35: #{tpu_custom_call.1} parent=31 // pred_region
          %193 = dma.done %s186, 128
        $region36: #{tpu_custom_call.1} parent=31 // pred_fallthru
          _
        // Predicated region
        $region37: #{tpu_custom_call.1} parent=31 // pred_check
          %p194 = pneg %p94
        $region38: #{tpu_custom_call.1} parent=31 // pred_check_branch
          %196 = sbr.rel (%p194) target = $region40
        $region39: #{tpu_custom_call.1} parent=31 // pred_region
          %197 = dma.done [#allocation8], 512
        $region40: #{tpu_custom_call.1} parent=31 // pred_fallthru
          _
        %s198 = sand.u32 %s34, 1
        %s199 = scalar_lea.sflag [#allocation5], %s198
        %s200 = sand.u32 %s34, 1
        %s201 = smul.addr %s200, 8
        %s202 = scalar_lea.vmem [#allocation4], %s201
        %p203 = pneg %p47
        %p204 = pneg %p44
        %p205 = scmp.lt.s32.totalorder %s26, 1
        %s206 = scalar_select %p205, %s26, 1
        %s207 = smul.addr %s206, 2
        %s208 = scalar_lea.vmem %s2, %s207
        %p209 = pneg %p73
        %p210 = pneg %p70
        %p211 = pneg %p94
        %p212 = pneg %p91
        %p213 = pneg %p120
        %p214 = pneg %p117
        %s215 = sand.u32 %s107, 1
        %s216 = scalar_lea.sflag [#allocation6], %s215
        %s217 = sand.u32 %s107, 1
        %s218 = scalar_lea.vmem [#allocation9], %s217
        %p219 = scmp.lt.s32.totalorder %s26, 1
        %s220 = scalar_select %p219, %s26, 1
        %s221 = smul.addr %s220, 2
        %s222 = scalar_lea.vmem %s2, %s221
        %v223 = vld [vmem:[%s189] sm:$0xff]
        %v224 = vld [vmem:[%s222] sm:$0x3]
        %vm225 = vcmp.eq.s32.totalorder %v224, 0
        %v228 = vunpack.c.l.s4 1966171168
        %v229 = vunpack.c.0.s8 %v228
        %v230 = vlaneseq
        %v231 = vshrl.u32 %v230, 7
        %v232 = vsub.s32 %v229, %v231
        %v233 = vrot.slane %v223, %v232
        %v235 = vunpack.c.l.s4 1966171168
        %v236 = vunpack.c.0.s8 %v235
        %v237 = vlaneseq
        %v238 = vshrl.u32 %v237, 7
        %v239 = vsub.s32 %v236, %v238
        %v240 = vrot.slane %v233, %v239
        %v242 = vsel %vm225, %v240, 0.0
        %vm243 = vcmp.eq.s32.totalorder %v224, 1
        %v244 = vcombine.high %v233, %v233
        %v246 = vunpack.c.l.s4 1966171168
        %v247 = vunpack.c.0.s8 %v246
        %v248 = vlaneseq
        %v249 = vshrl.u32 %v248, 7
        %v250 = vsub.s32 %v247, %v249
        %v251 = vrot.slane %v244, %v250
        %v253 = vsel %vm243, %v251, 0.0
        %v254 = vadd.f32 %v242, %v253
        %v255 = vrot.slane %v223, 7
        %vm257 = vcmp.gt.f32.partialorder %v223, %v255
        %v258 = vsel %vm257, %v223, %v255
        %v259 = vsel %vm257, 1.0, 0.0
        %vm260 = vcmp.eq.s32.totalorder %v224, 2
        %v261 = vcombine.high %v240, %v240
        %v263 = vsel %vm260, %v261, 0.0
        %v264 = vadd.f32 %v254, %v263
        %v266 = vrot.slane %v258, 7
        %vm268 = vcmp.gt.f32.partialorder %v223, %v266
        %v269 = vsel %vm268, %v223, %v266
        %v271 = vrot.slane %v259, 7
        %v273 = vsel %vm268, 2.0, %v271
        %vm274 = vcmp.eq.s32.totalorder %v224, 3
        %v275 = vcombine.high %v251, %v251
        %v277 = vsel %vm274, %v275, 0.0
        %v278 = vadd.f32 %v264, %v277
        %v280 = vrot.slane %v269, 7
        %vm282 = vcmp.gt.f32.partialorder %v223, %v280
        %v283 = vsel %vm282, %v223, %v280
        %v285 = vrot.slane %v273, 7
        %v287 = vsel %vm282, 3.0, %v285
        %v289 = vlaneseq
        %v290 = vshrl.u32 %v289, 7
        %v291 = vsub.s32 3, %v290
        %v292 = vrot.slane %v283, %v291
        %v293 = vlaneseq
        %v294 = vshrl.u32 %v293, 7
        %v295 = vsub.s32 7, %v294
        %v296 = vrot.slane %v283, %v295
        %v299 = vlaneseq
        %v300 = vshrl.u32 %v299, 7
        %v301 = vsub.s32 3, %v300
        %v302 = vrot.slane %v292, %v301
        %v303 = vlaneseq
        %v304 = vshrl.u32 %v303, 7
        %v305 = vsub.s32 3, %v304
        %v306 = vrot.slane %v296, %v305
        %v309 = vcombine.low %v302, %v306
        %v311 = vsub.f32 %v223, %v309
        %v312 = vmul.f32 %v311, 1.442695
        %v313 = vpow.pop %v312
        %v315 = vcombine.high %v313, %v313
        %vm317 = vcmask 1043456
        %v318 = vsel %vm317, %v313, 0.0
        %v319 = vrot.slane %v318, 4
        %v320 = vadd.f32 %v318, %v319
        %v321 = vrot.slane %v320, 2
        %v322 = vadd.f32 %v320, %v321
        %v323 = vrot.slane %v322, 1
        %v324 = vadd.f32 %v322, %v323
        %v325 = vsel %vm317, %v315, 0.0
        %v326 = vrot.slane %v325, 4
        %v327 = vadd.f32 %v325, %v326
        %v328 = vrot.slane %v327, 2
        %v329 = vadd.f32 %v327, %v328
        %v330 = vrot.slane %v329, 1
        %v331 = vadd.f32 %v329, %v330
        %v332 = vlog2.pop %v324
        %v333 = vmul.f32 %v332, 0.6931472
        %v334 = vlog2.pop %v331
        %v335 = vmul.f32 %v334, 0.6931472
        %v338 = vcombine.low %v333, %v335
        %v339 = vrot.slane %v338, 5
        %v341 = vadd.f32 %v283, %v339
        %v344 = vunpack.c.l.s4 286326784
        %v345 = vunpack.c.0.s8 %v344
        %v346 = vlaneseq
        %v347 = vshrl.u32 %v346, 7
        %v348 = vsub.s32 %v345, %v347
        %v349 = vrot.slane %v278, %v348
        %v351 = vsub.f32 %v341, %v349
        %v353 = vlaneseq
        %v354 = vshrl.u32 %v353, 7
        %v355 = vsub.s32 3, %v354
        %v356 = vrot.slane %v351, %v355
        %v357 = vlaneseq
        %v358 = vshrl.u32 %v357, 7
        %v359 = vsub.s32 7, %v358
        %v360 = vrot.slane %v351, %v359
        %vm363 = vcmask 1040384
        %v364 = vsel %vm363, %v356, 0.0
        %v365 = vsel %vm363, %v360, 0.0
        %v366 = vadd.f32 %v364, %v365
        %367 = vadd.xlane.f32.xlu0 %v366
        %v368 = vpop.xlane.xlu0 %367
        %v369 = vrot.slane %v368, 4
        %v370 = vadd.f32 %v368, %v369
        %v371 = vrot.slane %v370, 2
        %v372 = vadd.f32 %v370, %v371
        %v373 = vrot.slane %v372, 1
        %v374 = vadd.f32 %v372, %v373
        %s375 = vtos %v374
        %v376 = vcvt.s32.f32 %v224
        %v379 = vunpack.c.l.s4 286326784
        %v380 = vunpack.c.0.s8 %v379
        %v381 = vlaneseq
        %v382 = vshrl.u32 %v381, 7
        %v383 = vsub.s32 %v380, %v382
        %v384 = vrot.slane %v376, %v383
        %v386 = vmul.f32 %v287, %v384
        %v388 = vlaneseq
        %v389 = vshrl.u32 %v388, 7
        %v390 = vsub.s32 3, %v389
        %v391 = vrot.slane %v386, %v390
        %v392 = vlaneseq
        %v393 = vshrl.u32 %v392, 7
        %v394 = vsub.s32 7, %v393
        %v395 = vrot.slane %v386, %v394
        %v398 = vsel %vm363, %v391, 0.0
        %v399 = vsel %vm363, %v395, 0.0
        %v400 = vadd.f32 %v398, %v399
        %401 = vadd.xlane.f32.xlu0 %v400
        %v402 = vpop.xlane.xlu0 %401
        %v403 = vrot.slane %v402, 4
        %v404 = vadd.f32 %v402, %v403
        %v405 = vrot.slane %v404, 2
        %v406 = vadd.f32 %v404, %v405
        %v407 = vrot.slane %v406, 1
        %v408 = vadd.f32 %v406, %v407
        %s409 = vtos %v408
        %v410 = vadd.f32 %v287, %v384
        %v412 = vlaneseq
        %v413 = vshrl.u32 %v412, 7
        %v414 = vsub.s32 3, %v413
        %v415 = vrot.slane %v410, %v414
        %v416 = vlaneseq
        %v417 = vshrl.u32 %v416, 7
        %v418 = vsub.s32 7, %v417
        %v419 = vrot.slane %v410, %v418
        %v422 = vsel %vm363, %v415, 0.0
        %v423 = vsel %vm363, %v419, 0.0
        %v424 = vadd.f32 %v422, %v423
        %425 = vadd.xlane.f32.xlu0 %v424
        %v426 = vpop.xlane.xlu0 %425
        %v427 = vrot.slane %v426, 4
        %v428 = vadd.f32 %v426, %v427
        %v429 = vrot.slane %v428, 2
        %v430 = vadd.f32 %v428, %v429
        %v431 = vrot.slane %v430, 1
        %v432 = vadd.f32 %v430, %v431
        %s433 = vtos %v432
        %v435 = vlaneseq
        %v436 = vshrl.u32 %v435, 7
        %v437 = vsub.s32 3, %v436
        %v438 = vrot.slane %v287, %v437
        %v439 = vlaneseq
        %v440 = vshrl.u32 %v439, 7
        %v441 = vsub.s32 7, %v440
        %v442 = vrot.slane %v287, %v441
        %445 = vrot.lane.b32.xlu0 %v438, 17
        %v446 = vpop.permute.xlu0 %445
        %447 = vrot.lane.b32.xlu0 %v442, 17
        %v448 = vpop.permute.xlu0 %447
        %v449 = vlaneseq
        %v450 = vand.u32 %v449, 127
        %vm451 = vcmp.lt.s32.totalorder %v450, 17
        %v452 = vsel %vm451, %v446, %v448
        %v453 = vsel %vm451, %v448, %v446
        %v454 = vld [vmem:[#allocation7] ss:$8 sm:$0x3]
        %v456 = vlaneseq
        %v457 = vshrl.u32 %v456, 7
        %v458 = vsub.s32 0, %v457
        %v459 = vrot.slane %v454, %v458
        %v460 = vlaneseq
        %v461 = vshrl.u32 %v460, 7
        %v462 = vsub.s32 1, %v461
        %v463 = vrot.slane %v454, %v462
        %v466 = vmul.f32 %v453, %v459
        %v467 = vmul.f32 %v452, %v463
        %468 = vrot.lane.b32.xlu0 %v438, 16
        %v469 = vpop.permute.xlu0 %468
        %470 = vrot.lane.b32.xlu0 %v442, 16
        %v471 = vpop.permute.xlu0 %470
        %vm472 = vcmp.lt.s32.totalorder %v450, 16
        %v473 = vsel %vm472, %v469, %v471
        %v474 = vsel %vm472, %v471, %v469
        %s475 = scalar_lea.vmem [#allocation7], 1
        %v476 = vld [vmem:[%s475] ss:$8 sm:$0x3]
        %v478 = vlaneseq
        %v479 = vshrl.u32 %v478, 7
        %v480 = vsub.s32 0, %v479
        %v481 = vrot.slane %v476, %v480
        %v482 = vlaneseq
        %v483 = vshrl.u32 %v482, 7
        %v484 = vsub.s32 1, %v483
        %v485 = vrot.slane %v476, %v484
        %v488 = vmul.f32 %v474, %v481
        %v489 = vmul.f32 %v473, %v485
        %490 = vrot.lane.b32.xlu0 %v438, 15
        %v491 = vpop.permute.xlu0 %490
        %492 = vrot.lane.b32.xlu0 %v442, 15
        %v493 = vpop.permute.xlu0 %492
        %vm494 = vcmp.lt.s32.totalorder %v450, 15
        %v495 = vsel %vm494, %v491, %v493
        %v496 = vsel %vm494, %v493, %v491
        %s497 = scalar_lea.vmem [#allocation7], 2
        %v498 = vld [vmem:[%s497] ss:$8 sm:$0x3]
        %v500 = vlaneseq
        %v501 = vshrl.u32 %v500, 7
        %v502 = vsub.s32 0, %v501
        %v503 = vrot.slane %v498, %v502
        %v504 = vlaneseq
        %v505 = vshrl.u32 %v504, 7
        %v506 = vsub.s32 1, %v505
        %v507 = vrot.slane %v498, %v506
        %v510 = vmul.f32 %v496, %v503
        %v511 = vmul.f32 %v495, %v507
        %512 = vrot.lane.b32.xlu0 %v438, 1
        %v513 = vpop.permute.xlu0 %512
        %514 = vrot.lane.b32.xlu0 %v442, 1
        %v515 = vpop.permute.xlu0 %514
        %vm516 = vcmp.lt.s32.totalorder %v450, 1
        %v517 = vsel %vm516, %v513, %v515
        %v518 = vsel %vm516, %v515, %v513
        %s519 = scalar_lea.vmem [#allocation7], 3
        %v520 = vld [vmem:[%s519] ss:$8 sm:$0x3]
        %v522 = vlaneseq
        %v523 = vshrl.u32 %v522, 7
        %v524 = vsub.s32 0, %v523
        %v525 = vrot.slane %v520, %v524
        %v526 = vlaneseq
        %v527 = vshrl.u32 %v526, 7
        %v528 = vsub.s32 1, %v527
        %v529 = vrot.slane %v520, %v528
        %v532 = vmul.f32 %v518, %v525
        %v533 = vmul.f32 %v517, %v529
        %s534 = scalar_lea.vmem [#allocation7], 4
        %v535 = vld [vmem:[%s534] ss:$8 sm:$0x3]
        %v538 = vunpack.c.l.s4 286326784
        %v539 = vunpack.c.0.s8 %v538
        %v540 = vlaneseq
        %v541 = vshrl.u32 %v540, 7
        %v542 = vsub.s32 %v539, %v541
        %v543 = vrot.slane %v535, %v542
        %v545 = vmul.f32 %v287, %v543
        %546 = vrot.lane.b32.xlu0 %v438, 127
        %v547 = vpop.permute.xlu0 %546
        %548 = vrot.lane.b32.xlu0 %v442, 127
        %v549 = vpop.permute.xlu0 %548
        %vm550 = vcmp.lt.s32.totalorder %v450, 127
        %v551 = vsel %vm550, %v547, %v549
        %v552 = vsel %vm550, %v549, %v547
        %s553 = scalar_lea.vmem [#allocation7], 5
        %v554 = vld [vmem:[%s553] ss:$8 sm:$0x3]
        %v556 = vlaneseq
        %v557 = vshrl.u32 %v556, 7
        %v558 = vsub.s32 0, %v557
        %v559 = vrot.slane %v554, %v558
        %v560 = vlaneseq
        %v561 = vshrl.u32 %v560, 7
        %v562 = vsub.s32 1, %v561
        %v563 = vrot.slane %v554, %v562
        %v566 = vmul.f32 %v551, %v559
        %v567 = vmul.f32 %v552, %v563
        %568 = vrot.lane.b32.xlu0 %v438, 113
        %v569 = vpop.permute.xlu0 %568
        %570 = vrot.lane.b32.xlu0 %v442, 113
        %v571 = vpop.permute.xlu0 %570
        %vm572 = vcmp.lt.s32.totalorder %v450, 113
        %v573 = vsel %vm572, %v569, %v571
        %v574 = vsel %vm572, %v571, %v569
        %s575 = scalar_lea.vmem [#allocation7], 6
        %v576 = vld [vmem:[%s575] ss:$8 sm:$0x3]
        %v578 = vlaneseq
        %v579 = vshrl.u32 %v578, 7
        %v580 = vsub.s32 0, %v579
        %v581 = vrot.slane %v576, %v580
        %v582 = vlaneseq
        %v583 = vshrl.u32 %v582, 7
        %v584 = vsub.s32 1, %v583
        %v585 = vrot.slane %v576, %v584
        %v588 = vmul.f32 %v573, %v581
        %v589 = vmul.f32 %v574, %v585
        %590 = vrot.lane.b32.xlu0 %v438, 112
        %v591 = vpop.permute.xlu0 %590
        %592 = vrot.lane.b32.xlu0 %v442, 112
        %v593 = vpop.permute.xlu0 %592
        %vm594 = vcmp.lt.s32.totalorder %v450, 112
        %v595 = vsel %vm594, %v591, %v593
        %v596 = vsel %vm594, %v593, %v591
        %s597 = scalar_lea.vmem [#allocation7], 7
        %v598 = vld [vmem:[%s597] ss:$8 sm:$0x3]
        %v600 = vlaneseq
        %v601 = vshrl.u32 %v600, 7
        %v602 = vsub.s32 0, %v601
        %v603 = vrot.slane %v598, %v602
        %v604 = vlaneseq
        %v605 = vshrl.u32 %v604, 7
        %v606 = vsub.s32 1, %v605
        %v607 = vrot.slane %v598, %v606
        %v610 = vmul.f32 %v595, %v603
        %v611 = vmul.f32 %v596, %v607
        %612 = vrot.lane.b32.xlu0 %v438, 111
        %v613 = vpop.permute.xlu0 %612
        %614 = vrot.lane.b32.xlu0 %v442, 111
        %v615 = vpop.permute.xlu0 %614
        %vm616 = vcmp.lt.s32.totalorder %v450, 111
        %v617 = vsel %vm616, %v613, %v615
        %v618 = vsel %vm616, %v615, %v613
        %s619 = scalar_lea.vmem [#allocation7], 16
        %v620 = vld [vmem:[%s619] ss:$8 sm:$0x3]
        %v622 = vlaneseq
        %v623 = vshrl.u32 %v622, 7
        %v624 = vsub.s32 0, %v623
        %v625 = vrot.slane %v620, %v624
        %v626 = vlaneseq
        %v627 = vshrl.u32 %v626, 7
        %v628 = vsub.s32 1, %v627
        %v629 = vrot.slane %v620, %v628
        %v632 = vmul.f32 %v617, %v625
        %v633 = vmul.f32 %v618, %v629
        %s634 = sld [smem:[#allocation3]]
        %v635 = vstv %s634
        %v636 = vmul.f32 %v635, %v466
        %v637 = vmul.f32 %v635, %v467
        %v638 = vadd.f32 %v636, 0.0
        %v639 = vadd.f32 %v637, 0.0
        %s640 = sld [smem:[#allocation3 + $0x1]]
        %v641 = vstv %s640
        %v642 = vmul.f32 %v641, %v488
        %v643 = vmul.f32 %v641, %v489
        %v644 = vadd.f32 %v638, %v642
        %v645 = vadd.f32 %v639, %v643
        %s646 = sld [smem:[#allocation3 + $0x2]]
        %v647 = vstv %s646
        %v648 = vmul.f32 %v647, %v510
        %v649 = vmul.f32 %v647, %v511
        %v650 = vadd.f32 %v644, %v648
        %v651 = vadd.f32 %v645, %v649
        %s652 = sld [smem:[#allocation3 + $0x3]]
        %v653 = vstv %s652
        %v654 = vmul.f32 %v653, %v532
        %v655 = vmul.f32 %v653, %v533
        %v656 = vadd.f32 %v650, %v654
        %v657 = vadd.f32 %v651, %v655
        %s658 = sld [smem:[#allocation3 + $0x4]]
        %v659 = vstv %s658
        %v660 = vmul.f32 %v659, %v545
        %v662 = vlaneseq
        %v663 = vshrl.u32 %v662, 7
        %v664 = vsub.s32 3, %v663
        %v665 = vrot.slane %v660, %v664
        %v666 = vlaneseq
        %v667 = vshrl.u32 %v666, 7
        %v668 = vsub.s32 7, %v667
        %v669 = vrot.slane %v660, %v668
        %v672 = vadd.f32 %v656, %v665
        %v673 = vadd.f32 %v657, %v669
        %s674 = sld [smem:[#allocation3 + $0x5]]
        %v675 = vstv %s674
        %v676 = vmul.f32 %v675, %v566
        %v677 = vmul.f32 %v675, %v567
        %v678 = vadd.f32 %v672, %v676
        %v679 = vadd.f32 %v673, %v677
        %s680 = sld [smem:[#allocation3 + $0x6]]
        %v681 = vstv %s680
        %v682 = vmul.f32 %v681, %v588
        %v683 = vmul.f32 %v681, %v589
        %v684 = vadd.f32 %v678, %v682
        %v685 = vadd.f32 %v679, %v683
        %s686 = sld [smem:[#allocation3 + $0x7]]
        %v687 = vstv %s686
        %v688 = vmul.f32 %v687, %v610
        %v689 = vmul.f32 %v687, %v611
        %v690 = vadd.f32 %v684, %v688
        %v691 = vadd.f32 %v685, %v689
        %s692 = sld [smem:[#allocation3 + $0x8]]
        %v693 = vstv %s692
        %v694 = vmul.f32 %v693, %v632
        %v695 = vmul.f32 %v693, %v633
        %v696 = vadd.f32 %v690, %v694
        %v697 = vadd.f32 %v691, %v695
        %v698 = vmul.f32 %v696, %v696
        %v699 = vmul.f32 %v697, %v697
        %v700 = vsel %vm363, %v698, 0.0
        %v701 = vsel %vm363, %v699, 0.0
        %v702 = vadd.f32 %v700, %v701
        %703 = vadd.xlane.f32.xlu0 %v702
        %v704 = vpop.xlane.xlu0 %703
        %v705 = vrot.slane %v704, 4
        %v706 = vadd.f32 %v704, %v705
        %v707 = vrot.slane %v706, 2
        %v708 = vadd.f32 %v706, %v707
        %v709 = vrot.slane %v708, 1
        %v710 = vadd.f32 %v708, %v709
        %s711 = vtos %v710
        %s712 = sadd.f32 %s711, 0.0
        %s713 = sld [smem:[#allocation3 + $0x9]]
        %v714 = vstv %s713
        %v715 = vmul.f32 %v714, %v466
        %v716 = vmul.f32 %v714, %v467
        %v717 = vadd.f32 %v715, 0.0
        %v718 = vadd.f32 %v716, 0.0
        %s719 = sld [smem:[#allocation3 + $0xa]]
        %v720 = vstv %s719
        %v721 = vmul.f32 %v720, %v488
        %v722 = vmul.f32 %v720, %v489
        %v723 = vadd.f32 %v717, %v721
        %v724 = vadd.f32 %v718, %v722
        %s725 = sld [smem:[#allocation3 + $0xb]]
        %v726 = vstv %s725
        %v727 = vmul.f32 %v726, %v510
        %v728 = vmul.f32 %v726, %v511
        %v729 = vadd.f32 %v723, %v727
        %v730 = vadd.f32 %v724, %v728
        %s731 = sld [smem:[#allocation3 + $0xc]]
        %v732 = vstv %s731
        %v733 = vmul.f32 %v732, %v532
        %v734 = vmul.f32 %v732, %v533
        %v735 = vadd.f32 %v729, %v733
        %v736 = vadd.f32 %v730, %v734
        %s737 = sld [smem:[#allocation3 + $0xd]]
        %v738 = vstv %s737
        %v739 = vmul.f32 %v738, %v545
        %v741 = vlaneseq
        %v742 = vshrl.u32 %v741, 7
        %v743 = vsub.s32 3, %v742
        %v744 = vrot.slane %v739, %v743
        %v745 = vlaneseq
        %v746 = vshrl.u32 %v745, 7
        %v747 = vsub.s32 7, %v746
        %v748 = vrot.slane %v739, %v747
        %v751 = vadd.f32 %v735, %v744
        %v752 = vadd.f32 %v736, %v748
        %s753 = sld [smem:[#allocation3 + $0xe]]
        %v754 = vstv %s753
        %v755 = vmul.f32 %v754, %v566
        %v756 = vmul.f32 %v754, %v567
        %v757 = vadd.f32 %v751, %v755
        %v758 = vadd.f32 %v752, %v756
        %s759 = sld [smem:[#allocation3 + $0xf]]
        %v760 = vstv %s759
        %v761 = vmul.f32 %v760, %v588
        %v762 = vmul.f32 %v760, %v589
        %v763 = vadd.f32 %v757, %v761
        %v764 = vadd.f32 %v758, %v762
        %s765 = sld [smem:[#allocation3 + $0x10]]
        %v766 = vstv %s765
        %v767 = vmul.f32 %v766, %v610
        %v768 = vmul.f32 %v766, %v611
        %v769 = vadd.f32 %v763, %v767
        %v770 = vadd.f32 %v764, %v768
        %s771 = sld [smem:[#allocation3 + $0x11]]
        %v772 = vstv %s771
        %v773 = vmul.f32 %v772, %v632
        %v774 = vmul.f32 %v772, %v633
        %v775 = vadd.f32 %v769, %v773
        %v776 = vadd.f32 %v770, %v774
        %v777 = vmul.f32 %v775, %v775
        %v778 = vmul.f32 %v776, %v776
        %v779 = vsel %vm363, %v777, 0.0
        %v780 = vsel %vm363, %v778, 0.0
        %v781 = vadd.f32 %v779, %v780
        %782 = vadd.xlane.f32.xlu0 %v781
        %v783 = vpop.xlane.xlu0 %782
        %v784 = vrot.slane %v783, 4
        %v785 = vadd.f32 %v783, %v784
        %v786 = vrot.slane %v785, 2
        %v787 = vadd.f32 %v785, %v786
        %v788 = vrot.slane %v787, 1
        %v789 = vadd.f32 %v787, %v788
        %s790 = vtos %v789
        %s791 = sadd.f32 %s712, %s790
        %vm792 = vcmp.eq.s32.totalorder %v450, 0
        %vm793 = vcmp.eq.s32.totalorder %v450, 1
        %vm794 = vcmp.eq.s32.totalorder %v450, 2
        %vm795 = vcmp.eq.s32.totalorder %v450, 3
        %v796 = vstv %s791
        %v797 = vsel %vm795, %v796, 0.0
        %v798 = vstv %s433
        %v799 = vsel %vm794, %v798, %v797
        %v800 = vstv %s409
        %v801 = vsel %vm793, %v800, %v799
        %v802 = vstv %s375
        %v803 = vsel %vm792, %v802, %v801
        %804 = vst [vmem:[%s218] sm:$0x1] %v803
        %s805 = sand.u32 %s107, 1
        %s806 = scalar_lea.sflag [#allocation6], %s805
        %s807 = sand.u32 %s107, 1
        %s808 = scalar_lea.vmem [#allocation9], %s807
        // Predicated region
        $region41: #{tpu_custom_call.1} parent=31 // pred_check
          %p809 = pneg %p117
        $region42: #{tpu_custom_call.1} parent=31 // pred_check_branch
          %811 = sbr.rel (%p809) target = $region44
        $region43: #{tpu_custom_call.1} parent=31 // pred_region
          %s813 = ssub.s32 16, 16
          %814 = vsyncadd %s806, %s813
          %s815 = smul.addr %s26, 16
          %s816 = scalar_lea.hbm %s4, %s815
          %s818 = sshll.u32 %s808, 4
          %s819 = int_to_ptr.vmem [resolvable:$true] %s818
          %821 = dma.vmem_to_hbm [thread:$0]  %s819, 16, %s816, %s806
        $region44: #{tpu_custom_call.1} parent=31 // pred_fallthru
          _
      $region32: #{tpu_custom_call.1} parent=5 // pred_fallthru
        _
      %p822 = scmp.le.s32.totalorder 2, %s21
      // Predicated region
      $region45: #{tpu_custom_call.1} parent=5 // pred_check
        %p823 = pneg %p822
      $region46: #{tpu_custom_call.1} parent=5 // pred_check_branch
        %825 = sbr.rel (%p823) target = $region48
      $region47: #{tpu_custom_call.1} parent=5 // pred_region
        %s826 = ssub.s32 %s21, 2
        // Predicated region
        $region49: #{tpu_custom_call.1} parent=47 // pred_check
          %p827 = pneg %p123
        $region50: #{tpu_custom_call.1} parent=47 // pred_check_branch
          %829 = sbr.rel (%p827) target = $region52
        $region51: #{tpu_custom_call.1} parent=47 // pred_region
          %s830 = sand.u32 %s108, 1
          %s831 = scalar_lea.sflag [#allocation6], %s830
          %s832 = sand.u32 %s108, 1
          %s833 = scalar_lea.vmem [#allocation9], %s832
          %834 = dma.done %s831, 16
        $region52: #{tpu_custom_call.1} parent=47 // pred_fallthru
          _
      $region48: #{tpu_custom_call.1} parent=5 // pred_fallthru
        _
    $region6: #{tpu_custom_call.1} parent=1 // loop_footer
      %s25 = sadd.s32 1, %s21
    $region7: #{tpu_custom_call.1} parent=1 // loop_footer_branch
      %20 = sbr.rel target = $region3
    $region8: #{tpu_custom_call.1} parent=1 // loop_exit
      _
    %835 = vsyncpa [#allocation5], 1
    %s836 = scalar_lea.sflag [#allocation5], 1
    %837 = vsyncpa %s836, 1
    %838 = vsyncpa [#allocation8], 1
    %839 = vsyncpa [#allocation6], 1
    %s840 = scalar_lea.sflag [#allocation6], 1
    %841 = vsyncpa %s840, 1

</llo_original>
